<compile_context>
chip_gen: v6e
topology: v6e:2x2x1
jax: 0.10.0
libtpu: 0.0.40
codegen_flags: <defaults>
</compile_context>

<pallas_src>
import jax
import jax.numpy as jnp
from jax.experimental import pallas as pl
from jax.experimental.pallas import tpu as pltpu


def _round_up(x, m):
    return ((x + m - 1) // m) * m


# ----------------------------------------------------------------------------
# Pallas kernels
# ----------------------------------------------------------------------------

def _proj_pool_kernel(x_ref, w_ref, b_ref, o_ref, pooled_ref):
    # 1x1 conv on one frame: (D, C) @ (C, H*W) + b, fused with spatial mean.
    # NOTE: for very small C (e.g. C=4 in the test) the MXU is under-filled on
    # the contraction; Mosaic pads K internally, and at these sizes it is not
    # the bottleneck.
    x = x_ref[0]                                                   # (C, HW)
    y = (jnp.dot(w_ref[...], x, preferred_element_type=jnp.float32)
         + b_ref[...])                                             # (D, HW) f32
    o_ref[...] = y[None].astype(o_ref.dtype)                       # (1, D, HW)
    pooled_ref[...] = jnp.mean(y, axis=1).reshape(1, 1, -1).astype(pooled_ref.dtype)


def _heads_kernel(h_ref, w1_ref, b1_ref, wir_ref, w2_ref, bhead_ref, o_ref):
    # Fused prediction heads, lane-dense 128-wide output:
    #   cols 0:2  -> is_referred_head(h)            (no activation)
    #   cols 2:6  -> sigmoid(box_head(h))           (MLP: relu(h@w1+b1)@w2+b2)
    # wir/w2 are pre-padded to 128 output columns so every MXU push and every
    # store is full-lane-width.
    h = h_ref[...]                                                 # (tm, D)
    z = jnp.maximum(
        jnp.dot(h, w1_ref[...], preferred_element_type=jnp.float32) + b1_ref[...],
        0.0,
    )                                                              # (tm, D) f32
    out = (jnp.dot(h, wir_ref[...], preferred_element_type=jnp.float32)
           + jnp.dot(z, w2_ref[...], preferred_element_type=jnp.float32)
           + bhead_ref[...])                                       # (tm, 128) f32
    col = jax.lax.broadcasted_iota(jnp.int32, out.shape, 1)
    out = jnp.where((col >= 2) & (col < 6), jax.nn.sigmoid(out), out)
    o_ref[...] = out.astype(o_ref.dtype)


# ----------------------------------------------------------------------------
# Wrappers
# ----------------------------------------------------------------------------

def backbone_proj_1x1(x_tbchw, w_cd, b_d):
    """nn.Conv2d(C, d_model, kernel_size=1) on '(t b) c h w', fused with the
    spatial mean used by the transformer surrogate.  Returns
    (proj (T,B,D,H,W), pooled (T,B,D))."""
    T, B, C, H, W = x_tbchw.shape
    D = w_cd.shape[1]
    HW = H * W
    TB = T * B

    x = x_tbchw.reshape(TB, C, HW)       # metadata-only reshape, no transpose
    w = jnp.transpose(w_cd)              # (D, C), tiny
    b = b_d.reshape(D, 1)

    proj, pooled = pl.pallas_call(
        _proj_pool_kernel,
        out_shape=(
            jax.ShapeDtypeStruct((TB, D, HW), x.dtype),
            jax.ShapeDtypeStruct((TB, 1, D), jnp.float32),
        ),
        grid=(TB,),
        in_specs=[
            pl.BlockSpec((1, C, HW), lambda i: (i, 0, 0)),
            pl.BlockSpec((D, C), lambda i: (0, 0)),
            pl.BlockSpec((D, 1), lambda i: (0, 0)),
        ],
        out_specs=(
            pl.BlockSpec((1, D, HW), lambda i: (i, 0, 0)),
            pl.BlockSpec((1, 1, D), lambda i: (i, 0, 0)),
        ),
        compiler_params=pltpu.CompilerParams(dimension_semantics=("parallel",)),
    )(x, w, b)

    proj = proj.reshape(T, B, D, H, W)   # already NCHW-ordered, no transpose
    pooled = pooled.reshape(T, B, D)
    return proj, pooled


def prediction_heads(hs, params, *, tile_m=512):
    """is_referred_head + box_head(+sigmoid), fused, lane-dense output."""
    L, T, B, N, D = hs.shape
    M = L * T * B * N
    LANES = 128

    tm = min(tile_m, _round_up(M, 8))
    M_pad = _round_up(M, tm)
    h = hs.reshape(M, D)
    if M_pad != M:
        h = jnp.pad(h, ((0, M_pad - M), (0, 0)))

    # Pad the tiny (D,2)/(D,4) head weights out to 128 lane-dense columns.
    wir_pad = jnp.zeros((D, LANES), hs.dtype).at[:, 0:2].set(params["wir"])
    w2_pad = jnp.zeros((D, LANES), hs.dtype).at[:, 2:6].set(params["w2"])
    bhead = (jnp.zeros((1, LANES), jnp.float32)
             .at[0, 0:2].set(params["bir"])
             .at[0, 2:6].set(params["b2"]))

    packed = pl.pallas_call(
        _heads_kernel,
        out_shape=jax.ShapeDtypeStruct((M_pad, LANES), hs.dtype),
        grid=(M_pad // tm,),
        in_specs=[
            pl.BlockSpec((tm, D), lambda i: (i, 0)),
            pl.BlockSpec((D, D), lambda i: (0, 0)),
            pl.BlockSpec((1, D), lambda i: (0, 0)),
            pl.BlockSpec((D, LANES), lambda i: (0, 0)),
            pl.BlockSpec((D, LANES), lambda i: (0, 0)),
            pl.BlockSpec((1, LANES), lambda i: (0, 0)),
        ],
        out_specs=pl.BlockSpec((tm, LANES), lambda i: (i, 0)),
        compiler_params=pltpu.CompilerParams(dimension_semantics=("parallel",)),
    )(h, params["w1"], params["b1"].reshape(1, D), wir_pad, w2_pad, bhead)

    ir = packed[:M, 0:2].reshape(L, T, B, N, 2)
    box = packed[:M, 2:6].reshape(L, T, B, N, 4)   # sigmoid already applied
    return ir, box


def stmotr_forward(vid_embeds, params, *, num_decoder_layers=2, aux_loss=False):
    """STMOTR.forward.  `vid_embeds` stands in for backbone(samples)[-1] features."""
    T, B, C, H, W = vid_embeds.shape

    # backbone_proj (1x1 conv) over '(t b) c h w', with fused spatial mean.
    proj, pooled = backbone_proj_1x1(vid_embeds, params["proj_w"], params["proj_b"])

    # TODO(synk): STTransformer is external; minimal surrogate producing
    # hs of shape (L, T, B, num_queries, d_model) and vid_memory.
    q = params["query_embed"]                                    # (N, D)
    hs0 = q[None, None, :, :] + pooled[:, :, None, :]            # (T, B, N, D)
    hs = jnp.stack([hs0 * (0.5 + 0.5 * l) for l in range(num_decoder_layers)], axis=0)
    vid_memory = proj

    outputs_is_referred, outputs_coords = prediction_heads(hs, params)

    layer_outputs = []
    for l in range(hs.shape[0]):
        layer_outputs.append({
            "pred_boxes": outputs_coords[l],          # sigmoid applied in-kernel
            "pred_is_referred": outputs_is_referred[l],
        })
    out = dict(layer_outputs[-1])
    if aux_loss:
        out["aux_outputs"] = layer_outputs[:-1]
    return out, vid_memory, hs


# ----------------------------------------------------------------------------
# Deterministic parameter init (shapes follow STMOTR.__init__)
# ----------------------------------------------------------------------------

def init_params(key, *, backbone_channels, d_model, num_queries):
    ks = jax.random.split(key, 9)
    s = 0.1
    return {
        # backbone_proj: Conv2d(backbone_channels, d_model, 1) stored as (C, D)
        "proj_w": s * jax.random.normal(ks[0], (backbone_channels, d_model), jnp.float32),
        "proj_b": s * jax.random.normal(ks[1], (d_model,), jnp.float32),
        # is_referred_head: Linear(d_model, 2) stored as (D, 2)
        "wir": s * jax.random.normal(ks[2], (d_model, 2), jnp.float32),
        "bir": s * jax.random.normal(ks[3], (2,), jnp.float32),
        # box_head MLP: Linear(d_model, d_model), Linear(d_model, 4)
        "w1": s * jax.random.normal(ks[4], (d_model, d_model), jnp.float32),
        "b1": s * jax.random.normal(ks[5], (d_model,), jnp.float32),
        "w2": s * jax.random.normal(ks[6], (d_model, 4), jnp.float32),
        "b2": s * jax.random.normal(ks[7], (4,), jnp.float32),
        # query_embed: Embedding(num_queries, d_model)
        "query_embed": s * jax.random.normal(ks[8], (num_queries, d_model), jnp.float32),
    }


# ----------------------------------------------------------------------------
# Pure-JAX reference (for correctness check)
# ----------------------------------------------------------------------------

def reference_forward(vid_embeds, params, *, num_decoder_layers=2):
    T, B, C, H, W = vid_embeds.shape
    x = jnp.transpose(vid_embeds, (0, 1, 3, 4, 2))              # (T,B,H,W,C)
    proj = x @ params["proj_w"] + params["proj_b"]              # (T,B,H,W,D)
    proj = jnp.transpose(proj, (0, 1, 4, 2, 3))                 # (T,B,D,H,W)
    pooled = jnp.mean(proj, axis=(3, 4))
    hs0 = params["query_embed"][None, None, :, :] + pooled[:, :, None, :]
    hs = jnp.stack([hs0 * (0.5 + 0.5 * l) for l in range(num_decoder_layers)], axis=0)
    ir = hs @ params["wir"] + params["bir"]
    z = jax.nn.relu(hs @ params["w1"] + params["b1"])
    box = jax.nn.sigmoid(z @ params["w2"] + params["b2"])
    return {"pred_boxes": box[-1], "pred_is_referred": ir[-1]}


# ----------------------------------------------------------------------------

if __name__ == "__main__":
    T, B = 2, 2
    backbone_channels = 4
    H = W = 8
    d_model = 32
    num_queries = 8

    key = jax.random.PRNGKey(0)
    k_in, k_par = jax.random.split(key)
    vid_embeds = jax.random.normal(k_in, (T, B, backbone_channels, H, W), jnp.float32)
    params = init_params(k_par, backbone_channels=backbone_channels,
                         d_model=d_model, num_queries=num_queries)

    out, vid_memory, hs = stmotr_forward(vid_embeds, params)
    jax.block_until_ready(out["pred_boxes"])
    jax.block_until_ready(out["pred_is_referred"])

    ref = reference_forward(vid_embeds, params)
    assert jnp.allclose(out["pred_boxes"], ref["pred_boxes"], atol=1e-5, rtol=1e-5)
    assert jnp.allclose(out["pred_is_referred"], ref["pred_is_referred"], atol=1e-5, rtol=1e-5)
    assert out["pred_boxes"].shape == (T, B, num_queries, 4)
    assert out["pred_is_referred"].shape == (T, B, num_queries, 2)
    assert vid_memory.shape == (T, B, d_model, H, W)

    print("KERNEL_OK")
</pallas_src>

<mosaic_0001>
module attributes {stable_mosaic.version = 11 : i64} {
  func.func @_proj_pool_kernel(%arg0: i32, %arg1: memref<1x4x64xf32, #tpu.memory_space<vmem>>, %arg2: memref<32x4xf32, #tpu.memory_space<vmem>>, %arg3: memref<32x1xf32, #tpu.memory_space<vmem>>, %arg4: memref<1x32x64xf32, #tpu.memory_space<vmem>>, %arg5: memref<1x1x32xf32, #tpu.memory_space<vmem>>) attributes {dimension_semantics = [#tpu.dimension_semantics<parallel>], iteration_bounds = array<i64: 4>, scalar_prefetch = 0 : i64, scratch_operands = 0 : i64, tpu.core_type = #tpu.core_type<tc>, window_params = [{transform_indices = @transform_0, window_bounds = array<i64: 1, 4, 64>}, {pipeline_mode = #tpu.pipeline_mode<synchronous>, transform_indices = @transform_1, window_bounds = array<i64: 32, 4>}, {pipeline_mode = #tpu.pipeline_mode<synchronous>, transform_indices = @transform_2, window_bounds = array<i64: 32, 1>}, {transform_indices = @transform_3, window_bounds = array<i64: 1, 32, 64>}, {transform_indices = @transform_4, window_bounds = array<i64: 1, 1, 32>}]} {
    %c0 = arith.constant 0 : index
    %c0_0 = arith.constant 0 : index
    %c0_1 = arith.constant 0 : index
    %0 = vector.load %arg1[%c0, %c0_0, %c0_1] : memref<1x4x64xf32, #tpu.memory_space<vmem>>, vector<1x4x64xf32>
    %1 = vector.shape_cast %0 : vector<1x4x64xf32> to vector<4x64xf32>
    %c0_2 = arith.constant 0 : index
    %c0_3 = arith.constant 0 : index
    %2 = vector.load %arg2[%c0_2, %c0_3] : memref<32x4xf32, #tpu.memory_space<vmem>>, vector<32x4xf32>
    %cst = arith.constant dense<0.000000e+00> : vector<32x64xf32>
    %3 = tpu.matmul %2, %1, %cst {dimension_numbers = #tpu.dot_dimension_numbers<[1], [0], [0], [1], [0, 0, 1, 1], [], []>} : vector<32x4xf32>, vector<4x64xf32>, vector<32x64xf32> -> vector<32x64xf32>
    %c0_4 = arith.constant 0 : index
    %c0_5 = arith.constant 0 : index
    %4 = vector.load %arg3[%c0_4, %c0_5] : memref<32x1xf32, #tpu.memory_space<vmem>>, vector<32x1xf32>
    %5 = vector.broadcast %4 : vector<32x1xf32> to vector<32x64xf32>
    %6 = arith.addf %3, %5 : vector<32x64xf32>
    %7 = vector.shape_cast %6 : vector<32x64xf32> to vector<1x32x64xf32>
    %c0_6 = arith.constant 0 : index
    %c0_7 = arith.constant 0 : index
    %c0_8 = arith.constant 0 : index
    %8 = vector.load %arg4[%c0_6, %c0_7, %c0_8] : memref<1x32x64xf32, #tpu.memory_space<vmem>>, vector<1x32x64xf32>
    tpu.vector_store %arg4[%c0_6, %c0_7, %c0_8], %7 {strides = array<i32>} : memref<1x32x64xf32, #tpu.memory_space<vmem>>, vector<1x32x64xf32>,
    %cst_9 = arith.constant dense<0.000000e+00> : vector<32xf32>
    %9 = vector.multi_reduction <add>, %6, %cst_9 [1] : vector<32x64xf32> to vector<32xf32>
    %cst_10 = arith.constant 6.400000e+01 : f32
    %10 = vector.broadcast %cst_10 : f32 to vector<32xf32>
    %11 = arith.divf %9, %10 : vector<32xf32>
    %12 = vector.shape_cast %11 : vector<32xf32> to vector<1x1x32xf32>
    %c0_11 = arith.constant 0 : index
    %c0_12 = arith.constant 0 : index
    %c0_13 = arith.constant 0 : index
    %13 = vector.load %arg5[%c0_11, %c0_12, %c0_13] : memref<1x1x32xf32, #tpu.memory_space<vmem>>, vector<1x1x32xf32>
    tpu.vector_store %arg5[%c0_11, %c0_12, %c0_13], %12 {strides = array<i32>} : memref<1x1x32xf32, #tpu.memory_space<vmem>>, vector<1x1x32xf32>,
    return
  }
  func.func @transform_0(%arg0: i32) -> (i32, i32, i32) {
    %c0_i32 = arith.constant 0 : i32
    %c0_i32_0 = arith.constant 0 : i32
    %c0_i32_1 = arith.constant 0 : i32
    return %arg0, %c0_i32, %c0_i32_0 : i32, i32, i32
  }
  func.func @transform_1(%arg0: i32) -> (i32, i32) {
    %c0_i32 = arith.constant 0 : i32
    %c0_i32_0 = arith.constant 0 : i32
    %c0_i32_1 = arith.constant 0 : i32
    return %c0_i32, %c0_i32_0 : i32, i32
  }
  func.func @transform_2(%arg0: i32) -> (i32, i32) {
    %c0_i32 = arith.constant 0 : i32
    %c0_i32_0 = arith.constant 0 : i32
    %c0_i32_1 = arith.constant 0 : i32
    return %c0_i32, %c0_i32_0 : i32, i32
  }
  func.func @transform_3(%arg0: i32) -> (i32, i32, i32) {
    %c0_i32 = arith.constant 0 : i32
    %c0_i32_0 = arith.constant 0 : i32
    %c0_i32_1 = arith.constant 0 : i32
    return %arg0, %c0_i32, %c0_i32_0 : i32, i32, i32
  }
  func.func @transform_4(%arg0: i32) -> (i32, i32, i32) {
    %c0_i32 = arith.constant 0 : i32
    %c0_i32_0 = arith.constant 0 : i32
    %c0_i32_1 = arith.constant 0 : i32
    return %arg0, %c0_i32, %c0_i32_0 : i32, i32, i32
  }
}

</mosaic_0001>

<llo_original>
// kernel: tpu_custom_call.1
$region0: #{tpu_custom_call.1}
  #allocation0 [shape = 'u32[]', space=smem, size = 0x4, offset = 0x4, fixed_abs, tag = 'smem constant byte address 0x4 - core index']
  #allocation1 [shape = 'u32[144,128]{1,0:T(1,128)}', space=vmem, size = 0x12000, scoped, tag = 'internal scratch']
  %s0 = inlined_call_operand.vmem [shape: f32[4,4,64], index: 0, kind: input, shape index: {}]
  %s1 = inlined_call_operand.vmem [shape: f32[32,4], index: 1, kind: input, shape index: {}]
  %s2 = inlined_call_operand.vmem [shape: f32[32,1], index: 2, kind: input, shape index: {}]
  %s3 = inlined_call_operand.hbm [shape: f32[4,32,64], index: 3, kind: output, shape index: {0}]
  %s4 = inlined_call_operand.hbm [shape: f32[4,1,32], index: 4, kind: output, shape index: {1}]
  %5 = xla_tuple %s3, %s4
  %s6 = sld [smem:[#allocation0]]
  $region53: #{tpu_custom_call.1} parent=0
    _
  %s8 = ssub.s32 1, %s6
  %s9 = scalar_select 0, %s8, %s6
  $region1: #{tpu_custom_call.1} parent=0
    #allocation2 [shape = 'u8[32768]{0}', space=vmem, size = 0x8000, scoped, tag = 'output window, operand 0']
    #allocation3 [shape = 's32[2]{0}', space=sflag, size = 0x8, scoped, tag = 'scoped memory for tpu_custom_call.1']
    #allocation4 [shape = 'u8[1024]{0}', space=vmem, size = 0x400, scoped, tag = 'output window, operand 1']
    #allocation5 [shape = 's32[2]{0}', space=sflag, size = 0x8, scoped, tag = 'scoped memory for tpu_custom_call.1']
    %10 = vsyncpa [#allocation3], 0
    %s11 = scalar_lea.sflag [#allocation3], 1
    %12 = vsyncpa %s11, 0
    %13 = vsyncpa [#allocation5], 0
    %s14 = scalar_lea.sflag [#allocation5], 1
    %15 = vsyncpa %s14, 0
    loop: start=0, step=1, limit=6
    $region2: #{tpu_custom_call.1} parent=1 // loop_pre_header
      _
    $region3: #{tpu_custom_call.1} parent=1 // loop_header
      %s17 = sphi 0, %s21
      %p18 = scmp.ge.s32.totalorder %s17, 6
      %s27 = sphi 0, %s29
      %s30 = sphi 0, %s27
      %s31 = sphi 0, %s30
      %s47 = sphi 0, %s31
      %s51 = sphi 0, %s51
      %s53 = sphi 0, %s51
      %s54 = sphi 0, %s53
      %s68 = sphi 0, %s54
      %s72 = sphi 0, %s72
      %s74 = sphi 0, %s72
      %s75 = sphi 0, %s74
      %s89 = sphi 0, %s75
      %s95 = sphi 0, %s97
      %s98 = sphi 0, %s95
      %s99 = sphi 0, %s98
      %s115 = sphi 0, %s99
      %s121 = sphi 0, %s123
      %s124 = sphi 0, %s121
      %s125 = sphi 0, %s124
      %s141 = sphi 0, %s125
    $region4: #{tpu_custom_call.1} parent=1 // loop_header_branch
      %20 = sbr.rel (%p18) target = $region8
    $region5: #{tpu_custom_call.1} parent=1 // loop_body
      %s22 = ssub.s32 %s17, 1
      %s23 = ssub.s32 %s17, 2
      %s24 = sadd.s32 %s17, 1
      %s25 = ssub.s32 %s17, %s24
      %p26 = scmp.eq.s32.totalorder %s25, 0
      %s28 = sadd.s32 %s27, 1
      %s29 = scalar_select %p26, %s27, %s28
      %p32 = pneg %p26
      %p33 = scmp.eq.s32.totalorder %s17, 3
      %p34 = por %p32, %p33
      %p35 = scmp.ne.s32.totalorder %s27, %s30
      %p36 = scmp.eq.s32.totalorder %s17, 0
      %p37 = por %p35, %p36
      %p38 = scmp.ne.s32.totalorder %s27, %s30
      %p39 = scmp.eq.s32.totalorder %s22, 3
      %p40 = por %p38, %p39
      %p41 = scmp.ne.s32.totalorder %s30, %s31
      %p42 = scmp.eq.s32.totalorder %s22, 0
      %p43 = por %p41, %p42
      %p44 = scmp.ne.s32.totalorder %s30, %s31
      %p45 = scmp.eq.s32.totalorder %s23, 3
      %p46 = por %p44, %p45
      %p48 = scmp.ne.s32.totalorder %s31, %s47
      %p49 = scmp.eq.s32.totalorder %s23, 0
      %p50 = por %p48, %p49
      %s52 = sadd.s32 %s51, 1
      %p55 = scmp.eq.s32.totalorder %s17, 3
      %p56 = scmp.ne.s32.totalorder %s51, %s53
      %p57 = scmp.eq.s32.totalorder %s17, 0
      %p58 = por %p56, %p57
      %p59 = scmp.ne.s32.totalorder %s51, %s53
      %p60 = scmp.eq.s32.totalorder %s22, 3
      %p61 = por %p59, %p60
      %p62 = scmp.ne.s32.totalorder %s53, %s54
      %p63 = scmp.eq.s32.totalorder %s22, 0
      %p64 = por %p62, %p63
      %p65 = scmp.ne.s32.totalorder %s53, %s54
      %p66 = scmp.eq.s32.totalorder %s23, 3
      %p67 = por %p65, %p66
      %p69 = scmp.ne.s32.totalorder %s54, %s68
      %p70 = scmp.eq.s32.totalorder %s23, 0
      %p71 = por %p69, %p70
      %s73 = sadd.s32 %s72, 1
      %p76 = scmp.eq.s32.totalorder %s17, 3
      %p77 = scmp.ne.s32.totalorder %s72, %s74
      %p78 = scmp.eq.s32.totalorder %s17, 0
      %p79 = por %p77, %p78
      %p80 = scmp.ne.s32.totalorder %s72, %s74
      %p81 = scmp.eq.s32.totalorder %s22, 3
      %p82 = por %p80, %p81
      %p83 = scmp.ne.s32.totalorder %s74, %s75
      %p84 = scmp.eq.s32.totalorder %s22, 0
      %p85 = por %p83, %p84
      %p86 = scmp.ne.s32.totalorder %s74, %s75
      %p87 = scmp.eq.s32.totalorder %s23, 3
      %p88 = por %p86, %p87
      %p90 = scmp.ne.s32.totalorder %s75, %s89
      %p91 = scmp.eq.s32.totalorder %s23, 0
      %p92 = por %p90, %p91
      %s93 = ssub.s32 %s17, %s24
      %p94 = scmp.eq.s32.totalorder %s93, 0
      %s96 = sadd.s32 %s95, 1
      %s97 = scalar_select %p94, %s95, %s96
      %p100 = pneg %p94
      %p101 = scmp.eq.s32.totalorder %s17, 3
      %p102 = por %p100, %p101
      %p103 = scmp.ne.s32.totalorder %s95, %s98
      %p104 = scmp.eq.s32.totalorder %s17, 0
      %p105 = por %p103, %p104
      %p106 = scmp.ne.s32.totalorder %s95, %s98
      %p107 = scmp.eq.s32.totalorder %s22, 3
      %p108 = por %p106, %p107
      %p109 = scmp.ne.s32.totalorder %s98, %s99
      %p110 = scmp.eq.s32.totalorder %s22, 0
      %p111 = por %p109, %p110
      %p112 = scmp.ne.s32.totalorder %s98, %s99
      %p113 = scmp.eq.s32.totalorder %s23, 3
      %p114 = por %p112, %p113
      %p116 = scmp.ne.s32.totalorder %s99, %s115
      %p117 = scmp.eq.s32.totalorder %s23, 0
      %p118 = por %p116, %p117
      %s119 = ssub.s32 %s17, %s24
      %p120 = scmp.eq.s32.totalorder %s119, 0
      %s122 = sadd.s32 %s121, 1
      %s123 = scalar_select %p120, %s121, %s122
      %p126 = pneg %p120
      %p127 = scmp.eq.s32.totalorder %s17, 3
      %p128 = por %p126, %p127
      %p129 = scmp.ne.s32.totalorder %s121, %s124
      %p130 = scmp.eq.s32.totalorder %s17, 0
      %p131 = por %p129, %p130
      %p132 = scmp.ne.s32.totalorder %s121, %s124
      %p133 = scmp.eq.s32.totalorder %s22, 3
      %p134 = por %p132, %p133
      %p135 = scmp.ne.s32.totalorder %s124, %s125
      %p136 = scmp.eq.s32.totalorder %s22, 0
      %p137 = por %p135, %p136
      %p138 = scmp.ne.s32.totalorder %s124, %s125
      %p139 = scmp.eq.s32.totalorder %s23, 3
      %p140 = por %p138, %p139
      %p142 = scmp.ne.s32.totalorder %s125, %s141
      %p143 = scmp.eq.s32.totalorder %s23, 0
      %p144 = por %p142, %p143
      %p145 = scmp.le.s32.totalorder 1, %s17
      %p146 = scmp.lt.s32.totalorder %s17, 5
      %p147 = pnand %p145, %p146
      %p148 = pneg %p147
      // Predicated region
      $region9: #{tpu_custom_call.1} parent=5 // pred_check
        _
      $region10: #{tpu_custom_call.1} parent=5 // pred_check_branch
        %150 = sbr.rel (%p147) target = $region12
      $region11: #{tpu_custom_call.1} parent=5 // pred_region
        %s151 = ssub.s32 %s17, 1
        // Predicated region
        $region13: #{tpu_custom_call.1} parent=11 // pred_check
          %p152 = pneg %p64
        $region14: #{tpu_custom_call.1} parent=11 // pred_check_branch
          %154 = sbr.rel (%p152) target = $region16
        $region15: #{tpu_custom_call.1} parent=11 // pred_region
          _
        $region16: #{tpu_custom_call.1} parent=11 // pred_fallthru
          _
        // Predicated region
        $region17: #{tpu_custom_call.1} parent=11 // pred_check
          %p155 = pneg %p85
        $region18: #{tpu_custom_call.1} parent=11 // pred_check_branch
          %157 = sbr.rel (%p155) target = $region20
        $region19: #{tpu_custom_call.1} parent=11 // pred_region
          _
        $region20: #{tpu_custom_call.1} parent=11 // pred_fallthru
          _
      $region12: #{tpu_custom_call.1} parent=5 // pred_fallthru
        _
      %p158 = scmp.lt.s32.totalorder %s17, 4
      // Predicated region
      $region21: #{tpu_custom_call.1} parent=5 // pred_check
        %p159 = pneg %p158
      $region22: #{tpu_custom_call.1} parent=5 // pred_check_branch
        %161 = sbr.rel (%p159) target = $region24
      $region23: #{tpu_custom_call.1} parent=5 // pred_region
        // Predicated region
        $region25: #{tpu_custom_call.1} parent=23 // pred_check
          %p162 = pneg %p37
        $region26: #{tpu_custom_call.1} parent=23 // pred_check_branch
          %164 = sbr.rel (%p162) target = $region28
        $region27: #{tpu_custom_call.1} parent=23 // pred_region
          %p165 = scmp.lt.s32.totalorder %s17, 3
          %s166 = scalar_select %p165, %s17, 3
          %s167 = smul.addr %s166, 4
          %s168 = scalar_lea.vmem %s0, %s167
        $region28: #{tpu_custom_call.1} parent=23 // pred_fallthru
          _
      $region24: #{tpu_custom_call.1} parent=5 // pred_fallthru
        _
      %p169 = scmp.le.s32.totalorder 1, %s17
      %p170 = scmp.lt.s32.totalorder %s17, 5
      %p171 = pnand %p169, %p170
      %p172 = pneg %p171
      // Predicated region
      $region29: #{tpu_custom_call.1} parent=5 // pred_check
        _
      $region30: #{tpu_custom_call.1} parent=5 // pred_check_branch
        %174 = sbr.rel (%p171) target = $region32
      $region31: #{tpu_custom_call.1} parent=5 // pred_region
        %s175 = ssub.s32 %s17, 1
        %p176 = scmp.lt.s32.totalorder %s22, 3
        %s177 = scalar_select %p176, %s22, 3
        %s178 = smul.addr %s177, 4
        %s179 = scalar_lea.vmem %s0, %s178
        %p180 = pneg %p43
        %p181 = pneg %p40
        %p182 = pneg %p64
        %p183 = pneg %p61
        %p184 = pneg %p85
        %p185 = pneg %p82
        %p186 = pneg %p111
        %p187 = pneg %p108
        %s188 = sand.u32 %s98, 1
        %s189 = scalar_lea.sflag [#allocation3], %s188
        %s190 = sand.u32 %s98, 1
        %s191 = smul.addr %s190, 32
        %s192 = scalar_lea.vmem [#allocation2], %s191
        %p193 = pneg %p137
        %p194 = pneg %p134
        %s195 = sand.u32 %s124, 1
        %s196 = scalar_lea.sflag [#allocation5], %s195
        %s197 = sand.u32 %s124, 1
        %s198 = scalar_lea.vmem [#allocation4], %s197
        %p199 = scmp.lt.s32.totalorder %s22, 3
        %s200 = scalar_select %p199, %s22, 3
        %s201 = smul.addr %s200, 4
        %s202 = scalar_lea.vmem %s0, %s201
        %v203 = vld [vmem:[%s202] sm:$0xf]
        %v204 = vld [vmem:[%s1] sm:$0xff]
        %v205 = vld [vmem:[%s1 + $0x8] sm:$0xff]
        %v206 = vld [vmem:[%s1 + $0x10] sm:$0xff]
        %v207 = vld [vmem:[%s1 + $0x18] sm:$0xff]
        %v208 = vld [vmem:[%s2] sm:$0xff]
        %v209 = vld [vmem:[%s2 + $0x8] sm:$0xff]
        %v210 = vld [vmem:[%s2 + $0x10] sm:$0xff]
        %v211 = vld [vmem:[%s2 + $0x18] sm:$0xff]
        %213 = vset.pattern.permute.xlu0 0
        %214 = vperm.xlu0 %213, %v208
        %v215 = vpop.permute.xlu0 %214
        %218 = vset.pattern.permute.xlu0 0
        %219 = vperm.xlu0 %218, %v209
        %v220 = vpop.permute.xlu0 %219
        %223 = vset.pattern.permute.xlu0 0
        %224 = vperm.xlu0 %223, %v210
        %v225 = vpop.permute.xlu0 %224
        %228 = vset.pattern.permute.xlu0 0
        %229 = vperm.xlu0 %228, %v211
        %v230 = vpop.permute.xlu0 %229
        %vm232 = vcmask 31744
        %v234 = vsel %vm232, %v204, 0
        %v237 = vsel %vm232, %v205, 0
        %v240 = vsel %vm232, %v206, 0
        %v243 = vsel %vm232, %v207, 0
        %vm245 = vcmask 1043456
        %v247 = vsel %vm245, %v203, 0
        %249 = vmatprep.subr.mxu0 0.0
        %250 = vmatpush1.msra.mxu0 0.0
        %251 = vmatprep.subr.mxu0 0.0
        %252 = vmatpush1.msra.mxu0 0.0
        %253 = vmatprep.subr.mxu0 0.0
        %254 = vmatpush1.msra.mxu0 0.0
        %255 = vmatprep.subr.mxu0 0.0
        %256 = vmatpush1.msra.mxu0 0.0
        %257 = vmatprep.subr.mxu0 0.0
        %258 = vmatpush1.msra.mxu0 0.0
        %259 = vmatprep.subr.mxu0 0.0
        %260 = vmatpush1.msra.mxu0 0.0
        %261 = vmatprep.subr.mxu0 0.0
        %262 = vmatpush1.msra.mxu0 0.0
        %263 = vmatprep.subr.mxu0 0.0
        %264 = vmatpush1.msra.mxu0 0.0
        %265 = vmatprep.subr.mxu0 0.0
        %266 = vmatpush1.msra.mxu0 0.0
        %267 = vmatprep.subr.mxu0 0.0
        %268 = vmatpush1.msra.mxu0 0.0
        %269 = vmatprep.subr.mxu0 0.0
        %270 = vmatpush1.msra.mxu0 0.0
        %271 = vmatprep.subr.mxu0 0.0
        %272 = vmatpush1.msra.mxu0 0.0
        %273 = vmatprep.subr.mxu0 0.0
        %274 = vmatpush1.msra.mxu0 0.0
        %275 = vmatprep.subr.mxu0 0.0
        %276 = vmatpush1.msra.mxu0 0.0
        %277 = vmatprep.subr.mxu0 0.0
        %278 = vmatpush1.msra.mxu0 0.0
        %279 = vmatprep.subr.mxu0 0.0
        %280 = vmatpush1.msra.mxu0 %v247
        %281 = vmatprep.subr.mxu0 0.0
        %282 = vmatpush2.msra.mxu0 0.0
        %283 = vmatprep.subr.mxu0 0.0
        %284 = vmatpush2.msra.mxu0 0.0
        %285 = vmatprep.subr.mxu0 0.0
        %286 = vmatpush2.msra.mxu0 0.0
        %287 = vmatprep.subr.mxu0 0.0
        %288 = vmatpush2.msra.mxu0 0.0
        %289 = vmatprep.subr.mxu0 0.0
        %290 = vmatpush2.msra.mxu0 0.0
        %291 = vmatprep.subr.mxu0 0.0
        %292 = vmatpush2.msra.mxu0 0.0
        %293 = vmatprep.subr.mxu0 0.0
        %294 = vmatpush2.msra.mxu0 0.0
        %295 = vmatprep.subr.mxu0 0.0
        %296 = vmatpush2.msra.mxu0 0.0
        %297 = vmatprep.subr.mxu0 0.0
        %298 = vmatpush2.msra.mxu0 0.0
        %299 = vmatprep.subr.mxu0 0.0
        %300 = vmatpush2.msra.mxu0 0.0
        %301 = vmatprep.subr.mxu0 0.0
        %302 = vmatpush2.msra.mxu0 0.0
        %303 = vmatprep.subr.mxu0 0.0
        %304 = vmatpush2.msra.mxu0 0.0
        %305 = vmatprep.subr.mxu0 0.0
        %306 = vmatpush2.msra.mxu0 0.0
        %307 = vmatprep.subr.mxu0 0.0
        %308 = vmatpush2.msra.mxu0 0.0
        %309 = vmatprep.subr.mxu0 0.0
        %310 = vmatpush2.msra.mxu0 0.0
        %311 = vmatprep.subr.mxu0 0.0
        %312 = vmatpush2.msra.mxu0 0.0
        %313 = vmatprep.mubr.f32.mxu0 0.0
        %314 = vmatmul.mubr.f32.gmra.mxu0 %v234
        %v315 = vpop.f32.mrf.mxu0
        %v316 = vadd.f32 %v215, %v315
        %v317 = vpop.f32.mrf.mxu0
        %318 = vmatprep.mubr.f32.mxu0 0.0
        %319 = vmatmul.mubr.f32.gmra.mxu0 %v237
        %v320 = vpop.f32.mrf.mxu0
        %v321 = vadd.f32 %v220, %v320
        %v322 = vpop.f32.mrf.mxu0
        %323 = vmatprep.mubr.f32.mxu0 0.0
        %324 = vmatmul.mubr.f32.gmra.mxu0 %v240
        %v325 = vpop.f32.mrf.mxu0
        %v326 = vadd.f32 %v225, %v325
        %v327 = vpop.f32.mrf.mxu0
        %328 = vmatprep.mubr.f32.mxu0 0.0
        %329 = vmatmul.mubr.f32.gmra.mxu0 %v243
        %v330 = vpop.f32.mrf.mxu0
        %v331 = vadd.f32 %v230, %v330
        %v332 = vpop.f32.mrf.mxu0
        %333 = vdwg.mxu0
        %vm334 = vcmask 523264
        %335 = vst.msk [vmem:[%s192] sm:$0xff] %vm334, %v316
        %336 = vst.msk [vmem:[%s192 + $0x8] sm:$0xff] %vm334, %v321
        %337 = vst.msk [vmem:[%s192 + $0x10] sm:$0xff] %vm334, %v326
        %338 = vst.msk [vmem:[%s192 + $0x18] sm:$0xff] %vm334, %v331
        %v339 = vsel %vm334, %v316, 0.0
        %340 = vadd.xlane.f32.xlu0 %v339
        %v341 = vpop.xlane.xlu0 %340
        %v342 = vsel %vm334, %v321, 0.0
        %343 = vadd.xlane.f32.xlu0 %v342
        %v344 = vpop.xlane.xlu0 %343
        %v345 = vsel %vm334, %v326, 0.0
        %346 = vadd.xlane.f32.xlu0 %v345
        %v347 = vpop.xlane.xlu0 %346
        %v348 = vsel %vm334, %v331, 0.0
        %349 = vadd.xlane.f32.xlu0 %v348
        %v350 = vpop.xlane.xlu0 %349
        %v351 = vrcp.pop 64.0
        %v352 = vmul.f32 %v341, %v351
        %v353 = vmul.f32 %v344, %v351
        %v354 = vmul.f32 %v347, %v351
        %v355 = vmul.f32 %v350, %v351
        %v360 = vlaneseq
        %v361 = vand.u32 %v360, 127
        %v362 = vlaneseq
        %v363 = vshrl.u32 %v362, 7
        %v364 = vsub.s32 %v361, %v363
        %v365 = vrot.slane %v352, %v364
        %v366 = vadd.s32 %v361, 4294967288
        %v367 = vlaneseq
        %v368 = vshrl.u32 %v367, 7
        %v369 = vsub.s32 %v366, %v368
        %v370 = vrot.slane %v353, %v369
        %vm371 = vcmask 130112
        %v372 = vsel %vm371, %v370, %v365
        %v373 = vadd.s32 %v361, 4294967280
        %v374 = vlaneseq
        %v375 = vshrl.u32 %v374, 7
        %v376 = vsub.s32 %v373, %v375
        %v377 = vrot.slane %v354, %v376
        %vm378 = vcmask 195712
        %v379 = vsel %vm378, %v377, %v372
        %v380 = vadd.s32 %v361, 4294967272
        %v381 = vlaneseq
        %v382 = vshrl.u32 %v381, 7
        %v383 = vsub.s32 %v380, %v382
        %v384 = vrot.slane %v355, %v383
        %vm385 = vcmask 261312
        %v386 = vsel %vm385, %v384, %v379
        %vm388 = vcmask 253952
        %389 = vst.msk [vmem:[%s198] sm:$0x1] %vm388, %v386
        %s390 = sand.u32 %s98, 1
        %s391 = scalar_lea.sflag [#allocation3], %s390
        %s392 = sand.u32 %s98, 1
        %s393 = smul.addr %s392, 32
        %s394 = scalar_lea.vmem [#allocation2], %s393
        %s395 = sand.u32 %s124, 1
        %s396 = scalar_lea.sflag [#allocation5], %s395
        %s397 = sand.u32 %s124, 1
        %s398 = scalar_lea.vmem [#allocation4], %s397
        // Predicated region
        $region33: #{tpu_custom_call.1} parent=31 // pred_check
          %p399 = pneg %p108
        $region34: #{tpu_custom_call.1} parent=31 // pred_check_branch
          %401 = sbr.rel (%p399) target = $region36
        $region35: #{tpu_custom_call.1} parent=31 // pred_region
          %s403 = ssub.s32 512, 512
          %404 = vsyncadd %s391, %s403
          %s405 = smul.addr %s22, 4
          %s406 = smul.addr %s405, 128
          %s407 = scalar_lea.hbm %s3, %s406
          %s408 = sshll.u32 %s394, 4
          %s409 = int_to_ptr.vmem [resolvable:$true] %s408
          %414 = dma.vmem_to_hbm [thread:$0]  %s409, 512, %s407, %s391, 128, 128, 8
        $region36: #{tpu_custom_call.1} parent=31 // pred_fallthru
          _
        // Predicated region
        $region37: #{tpu_custom_call.1} parent=31 // pred_check
          %p415 = pneg %p134
        $region38: #{tpu_custom_call.1} parent=31 // pred_check_branch
          %417 = sbr.rel (%p415) target = $region40
        $region39: #{tpu_custom_call.1} parent=31 // pred_region
          %s419 = ssub.s32 16, 16
          %420 = vsyncadd %s396, %s419
          %s421 = smul.addr %s22, 16
          %s422 = scalar_lea.hbm %s4, %s421
          %s424 = sshll.u32 %s398, 4
          %s425 = int_to_ptr.vmem [resolvable:$true] %s424
          %427 = dma.vmem_to_hbm [thread:$0]  %s425, 16, %s422, %s396
        $region40: #{tpu_custom_call.1} parent=31 // pred_fallthru
          _
      $region32: #{tpu_custom_call.1} parent=5 // pred_fallthru
        _
      %p428 = scmp.le.s32.totalorder 2, %s17
      // Predicated region
      $region41: #{tpu_custom_call.1} parent=5 // pred_check
        %p429 = pneg %p428
      $region42: #{tpu_custom_call.1} parent=5 // pred_check_branch
        %431 = sbr.rel (%p429) target = $region44
      $region43: #{tpu_custom_call.1} parent=5 // pred_region
        %s432 = ssub.s32 %s17, 2
        // Predicated region
        $region45: #{tpu_custom_call.1} parent=43 // pred_check
          %p433 = pneg %p114
        $region46: #{tpu_custom_call.1} parent=43 // pred_check_branch
          %435 = sbr.rel (%p433) target = $region48
        $region47: #{tpu_custom_call.1} parent=43 // pred_region
          %s436 = sand.u32 %s99, 1
          %s437 = scalar_lea.sflag [#allocation3], %s436
          %s438 = sand.u32 %s99, 1
          %s439 = smul.addr %s438, 32
          %s440 = scalar_lea.vmem [#allocation2], %s439
          %441 = dma.done %s437, 512
        $region48: #{tpu_custom_call.1} parent=43 // pred_fallthru
          _
        // Predicated region
        $region49: #{tpu_custom_call.1} parent=43 // pred_check
          %p442 = pneg %p140
        $region50: #{tpu_custom_call.1} parent=43 // pred_check_branch
          %444 = sbr.rel (%p442) target = $region52
        $region51: #{tpu_custom_call.1} parent=43 // pred_region
          %s445 = sand.u32 %s125, 1
          %s446 = scalar_lea.sflag [#allocation5], %s445
          %s447 = sand.u32 %s125, 1
          %s448 = scalar_lea.vmem [#allocation4], %s447
          %449 = dma.done %s446, 16
        $region52: #{tpu_custom_call.1} parent=43 // pred_fallthru
          _
      $region44: #{tpu_custom_call.1} parent=5 // pred_fallthru
        _
    $region6: #{tpu_custom_call.1} parent=1 // loop_footer
      %s21 = sadd.s32 1, %s17
    $region7: #{tpu_custom_call.1} parent=1 // loop_footer_branch
      %16 = sbr.rel target = $region3
    $region8: #{tpu_custom_call.1} parent=1 // loop_exit
      _
    %450 = vsyncpa [#allocation3], 1
    %s451 = scalar_lea.sflag [#allocation3], 1
    %452 = vsyncpa %s451, 1
    %453 = vsyncpa [#allocation5], 1
    %s454 = scalar_lea.sflag [#allocation5], 1
    %455 = vsyncpa %s454, 1

</llo_original>
